<compile_context>
chip_gen: v6e
topology: v6e:2x2x1
jax: 0.10.0
libtpu: 0.0.40
codegen_flags: <defaults>
</compile_context>

<pallas_src>
import jax
import jax.numpy as jnp
from jax.experimental import pallas as pl
from jax.experimental.pallas import tpu as pltpu


def _make_mlp_kernel(num_layers: int, activation: str, input_size: int):
    """Build the fused-MLP Pallas kernel body for a fixed layer count."""

    if activation == "relu":
        act = lambda v: jnp.maximum(v, 0.0)
    elif activation == "softplus":
        # softplus(x) = log(1 + exp(x)), numerically stable form (f32 VPU/EUP math).
        act = lambda v: jnp.maximum(v, 0.0) + jnp.log1p(jnp.exp(-jnp.abs(v)))
    else:
        raise ValueError(activation)

    def kernel(*refs):
        # refs = (x_ref, w1, b1, [w_i, b_i]*num_layers, w_last, b_last, o_ref)
        x_ref = refs[0]
        o_ref = refs[-1]
        params = refs[1:-1]

        # ---- linear1: K = input_size (2 or 3) is tiny -> VPU outer product.
        # Avoids an MXU pass with K padded to 128; the (K, H) / (1, H) casts are
        # negligible.  Activation math stays in f32 (v5e has no bf16 VPU/EUP).
        w1 = params[0][...].astype(jnp.float32)          # (K, H)
        b1 = params[1][...].astype(jnp.float32)          # (1, H)
        x = x_ref[...].astype(jnp.float32)               # (tm, K)
        h = b1 + x[:, 0:1] * w1[0:1, :]
        for k in range(1, input_size):
            h = h + x[:, k:k + 1] * w1[k:k + 1, :]
        h = act(h)                                       # (tm, H) f32

        # ---- hidden layers on the MXU: inputs in storage dtype, f32 accumulate.
        for i in range(num_layers):
            wv = params[2 + 2 * i][...]                  # (H, H), storage dtype
            bv = params[3 + 2 * i][...]                  # (1, H)
            h = act(
                jnp.dot(h.astype(wv.dtype), wv,
                        preferred_element_type=jnp.float32)
                + bv.astype(jnp.float32)
            )

        # ---- last_linear (output padded to 128 lanes), no activation.
        wv = params[-2][...]                             # (H, 128)
        bv = params[-1][...]                             # (1, 128)
        out = (
            jnp.dot(h.astype(wv.dtype), wv,
                    preferred_element_type=jnp.float32)
            + bv.astype(jnp.float32)
        )
        o_ref[...] = out.astype(o_ref.dtype)

    return kernel


def init_mapping2dto3d_params(key, input_point_dim, hidden_size=512,
                              num_layers=2, dtype=jnp.float32):
    """Deterministic synthetic parameters (shapes follow the PyTorch module).

    Weights are stored transposed w.r.t. PyTorch: (in_features, out_features).
    """
    dims = [input_point_dim] + [hidden_size] * (num_layers + 1) + [3]
    params = []
    for i in range(len(dims) - 1):
        d_in, d_out = dims[i], dims[i + 1]
        key, kw, kb = jax.random.split(key, 3)
        scale = 1.0 / jnp.sqrt(jnp.float32(d_in))
        w = (jax.random.normal(kw, (d_in, d_out), jnp.float32) * scale).astype(dtype)
        b = (jax.random.normal(kb, (1, d_out), jnp.float32) * 0.01).astype(dtype)
        params.append((w, b))
    return params


def _round_up(a: int, m: int) -> int:
    return ((a + m - 1) // m) * m


def mapping2dto3d_forward(x, params, *, num_layers=2, activation="relu",
                          row_tile=256):
    """Forward pass of Mapping2Dto3D via a fused Pallas kernel.

    x: (..., input_point_dim). Returns (..., 3).
    """
    assert row_tile % 8 == 0, "row_tile must be a multiple of 8 (sublane layout)"
    input_size = params[0][0].shape[0]
    hidden = params[0][0].shape[1]
    assert x.shape[-1] == input_size
    lead_shape = x.shape[:-1]
    x2d = x.reshape(-1, input_size)
    n = x2d.shape[0]

    OUT_PAD = 128                       # lane-dense output (real out dim is 3)
    out_dim = params[-1][0].shape[1]    # 3

    # Zero-pad last-layer weight/bias to 128 output lanes -> unmasked stores,
    # and the MXU was padding to 128 lanes anyway.
    w_last, b_last = params[-1]
    w_last_p = jnp.pad(w_last, ((0, 0), (0, OUT_PAD - out_dim)))
    b_last_p = jnp.pad(b_last, ((0, 0), (0, OUT_PAD - out_dim)))

    # ---- row tile selection -------------------------------------------------
    n8 = _round_up(max(n, 1), 8)
    tm = min(row_tile, n8)
    # Keep >= ~4 grid steps when rows are plentiful (v7x 2-TC sharding + pipelining).
    if n8 >= 4 * 128:
        tm = min(tm, max(128, (n8 // 4) // 128 * 128))
    assert tm % 8 == 0
    n_pad = _round_up(n, tm)
    if n_pad != n:
        x2d = jnp.pad(x2d, ((0, n_pad - n), (0, 0)))

    # ---- flatten params (last layer replaced by padded version) -------------
    flat_params = []
    for (w, b) in params[:-1]:
        flat_params.extend([w, b])
    flat_params.extend([w_last_p, b_last_p])

    kernel = _make_mlp_kernel(num_layers, activation, input_size)

    def full_spec(arr):
        # Whole (small) parameter array resident for every grid step.
        shp = arr.shape
        return pl.BlockSpec(shp, lambda i, _s=shp: (0,) * len(_s))

    in_specs = [pl.BlockSpec((tm, input_size), lambda i: (i, 0))]
    in_specs += [full_spec(p) for p in flat_params]
    out_specs = pl.BlockSpec((tm, OUT_PAD), lambda i: (i, 0))

    # ---- cost estimate (scheduler hint) --------------------------------------
    flops = 2 * n_pad * (input_size * hidden
                         + num_layers * hidden * hidden
                         + hidden * OUT_PAD)
    transcendentals = 0 if activation == "relu" else 2 * n_pad * hidden * (num_layers + 1)
    param_bytes = sum(int(p.size) * p.dtype.itemsize for p in flat_params)
    bytes_accessed = (int(x2d.size) * x2d.dtype.itemsize
                      + n_pad * OUT_PAD * x.dtype.itemsize
                      + param_bytes)

    # ---- VMEM budget: double-buffered x/out tiles + (double-buffered) params
    # + a few (tm, hidden) f32 intermediates.  Cap at 64 MiB (v7x physical).
    vmem_est = (2 * (tm * input_size + tm * OUT_PAD) * 4
                + 2 * param_bytes
                + 6 * tm * hidden * 4)
    vmem_limit = int(min(max(2 * vmem_est, 32 << 20), 64 << 20))

    out = pl.pallas_call(
        kernel,
        out_shape=jax.ShapeDtypeStruct((n_pad, OUT_PAD), x.dtype),
        grid_spec=pltpu.PrefetchScalarGridSpec(
            num_scalar_prefetch=0,
            grid=(n_pad // tm,),
            in_specs=in_specs,
            out_specs=out_specs,
        ),
        compiler_params=pltpu.CompilerParams(
            dimension_semantics=("parallel",),
            vmem_limit_bytes=vmem_limit),
        cost_estimate=pl.CostEstimate(flops=flops,
                                      transcendentals=transcendentals,
                                      bytes_accessed=bytes_accessed),
    )(x2d, *flat_params)

    out = out[:n, :out_dim]
    return out.reshape(*lead_shape, out_dim)


def _reference_forward(x, params, activation="relu"):
    act = jax.nn.relu if activation == "relu" else jax.nn.softplus
    h = x.astype(jnp.float32)
    for i, (w, b) in enumerate(params):
        h = h @ w.astype(jnp.float32) + b.astype(jnp.float32)
        if i != len(params) - 1:
            h = act(h)
    return h.astype(x.dtype)


if __name__ == "__main__":
    key = jax.random.PRNGKey(0)
    k_x, k_p = jax.random.split(key)

    # Small shapes: batch=2, num_points=8, input_point_dim=2, hidden=32, 2 layers.
    input_point_dim = 2
    hidden_size = 32
    num_layers = 2
    x = jax.random.uniform(k_x, (2, 8, input_point_dim), jnp.float32)

    params = init_mapping2dto3d_params(
        k_p, input_point_dim, hidden_size=hidden_size, num_layers=num_layers)

    # --- f32 params, relu ---
    y = mapping2dto3d_forward(x, params, num_layers=num_layers,
                              activation="relu", row_tile=256)
    y = jax.block_until_ready(y)
    y_ref = _reference_forward(x.reshape(-1, input_point_dim), params,
                               activation="relu").reshape(2, 8, 3)
    assert y.shape == (2, 8, 3), y.shape
    assert jnp.allclose(y, y_ref, atol=1e-5, rtol=1e-5), "relu mismatch vs reference"

    # --- f32 params, softplus ---
    y_sp = mapping2dto3d_forward(x, params, num_layers=num_layers,
                                 activation="softplus", row_tile=256)
    y_sp = jax.block_until_ready(y_sp)
    y_sp_ref = _reference_forward(x.reshape(-1, input_point_dim), params,
                                  activation="softplus").reshape(2, 8, 3)
    assert jnp.allclose(y_sp, y_sp_ref, atol=1e-5, rtol=1e-5), "softplus mismatch"

    # --- bf16 params/inputs (exercises the bf16 MXU path), loose tolerance ---
    params_bf16 = [(w.astype(jnp.bfloat16), b.astype(jnp.bfloat16)) for (w, b) in params]
    x_bf16 = x.astype(jnp.bfloat16)
    y_bf = mapping2dto3d_forward(x_bf16, params_bf16, num_layers=num_layers,
                                 activation="relu", row_tile=256)
    y_bf = jax.block_until_ready(y_bf)
    assert y_bf.shape == (2, 8, 3)
    assert jnp.allclose(y_bf.astype(jnp.float32), y_ref, atol=5e-2, rtol=5e-2), \
        "bf16 path mismatch vs reference"

    print("KERNEL_OK")
</pallas_src>

<mosaic_0001>
module attributes {stable_mosaic.version = 11 : i64} {
  func.func @kernel(%arg0: i32, %arg1: memref<16x2xf32, #tpu.memory_space<vmem>>, %arg2: memref<2x32xf32, #tpu.memory_space<vmem>>, %arg3: memref<1x32xf32, #tpu.memory_space<vmem>>, %arg4: memref<32x32xf32, #tpu.memory_space<vmem>>, %arg5: memref<1x32xf32, #tpu.memory_space<vmem>>, %arg6: memref<32x32xf32, #tpu.memory_space<vmem>>, %arg7: memref<1x32xf32, #tpu.memory_space<vmem>>, %arg8: memref<32x128xf32, #tpu.memory_space<vmem>>, %arg9: memref<1x128xf32, #tpu.memory_space<vmem>>, %arg10: memref<16x128xf32, #tpu.memory_space<vmem>>) attributes {dimension_semantics = [#tpu.dimension_semantics<parallel>], iteration_bounds = array<i64: 1>, scalar_prefetch = 0 : i64, scratch_operands = 0 : i64, tpu.core_type = #tpu.core_type<tc>, window_params = [{transform_indices = @transform_0, window_bounds = array<i64: 16, 2>}, {pipeline_mode = #tpu.pipeline_mode<synchronous>, transform_indices = @transform_1, window_bounds = array<i64: 2, 32>}, {pipeline_mode = #tpu.pipeline_mode<synchronous>, transform_indices = @transform_2, window_bounds = array<i64: 1, 32>}, {pipeline_mode = #tpu.pipeline_mode<synchronous>, transform_indices = @transform_3, window_bounds = array<i64: 32, 32>}, {pipeline_mode = #tpu.pipeline_mode<synchronous>, transform_indices = @transform_4, window_bounds = array<i64: 1, 32>}, {pipeline_mode = #tpu.pipeline_mode<synchronous>, transform_indices = @transform_5, window_bounds = array<i64: 32, 32>}, {pipeline_mode = #tpu.pipeline_mode<synchronous>, transform_indices = @transform_6, window_bounds = array<i64: 1, 32>}, {pipeline_mode = #tpu.pipeline_mode<synchronous>, transform_indices = @transform_7, window_bounds = array<i64: 32, 128>}, {pipeline_mode = #tpu.pipeline_mode<synchronous>, transform_indices = @transform_8, window_bounds = array<i64: 1, 128>}, {transform_indices = @transform_9, window_bounds = array<i64: 16, 128>}]} {
    %c0 = arith.constant 0 : index
    %c0_0 = arith.constant 0 : index
    %0 = vector.load %arg2[%c0, %c0_0] : memref<2x32xf32, #tpu.memory_space<vmem>>, vector<2x32xf32>
    %c0_1 = arith.constant 0 : index
    %c0_2 = arith.constant 0 : index
    %1 = vector.load %arg3[%c0_1, %c0_2] : memref<1x32xf32, #tpu.memory_space<vmem>>, vector<1x32xf32>
    %c0_3 = arith.constant 0 : index
    %c0_4 = arith.constant 0 : index
    %2 = vector.load %arg1[%c0_3, %c0_4] : memref<16x2xf32, #tpu.memory_space<vmem>>, vector<16x2xf32>
    %3 = vector.extract_strided_slice %2 {offsets = [0, 0], sizes = [16, 1], strides = [1, 1]} : vector<16x2xf32> to vector<16x1xf32>
    %4 = vector.extract_strided_slice %0 {offsets = [0, 0], sizes = [1, 32], strides = [1, 1]} : vector<2x32xf32> to vector<1x32xf32>
    %5 = vector.broadcast %3 : vector<16x1xf32> to vector<16x32xf32>
    %6 = vector.broadcast %4 : vector<1x32xf32> to vector<16x32xf32>
    %7 = arith.mulf %5, %6 : vector<16x32xf32>
    %8 = vector.broadcast %1 : vector<1x32xf32> to vector<16x32xf32>
    %9 = arith.addf %8, %7 : vector<16x32xf32>
    %10 = vector.extract_strided_slice %2 {offsets = [0, 1], sizes = [16, 1], strides = [1, 1]} : vector<16x2xf32> to vector<16x1xf32>
    %11 = vector.extract_strided_slice %0 {offsets = [1, 0], sizes = [1, 32], strides = [1, 1]} : vector<2x32xf32> to vector<1x32xf32>
    %12 = vector.broadcast %10 : vector<16x1xf32> to vector<16x32xf32>
    %13 = vector.broadcast %11 : vector<1x32xf32> to vector<16x32xf32>
    %14 = arith.mulf %12, %13 : vector<16x32xf32>
    %15 = arith.addf %9, %14 : vector<16x32xf32>
    %cst = arith.constant 0.000000e+00 : f32
    %16 = vector.broadcast %cst : f32 to vector<16x32xf32>
    %17 = arith.maximumf %15, %16 : vector<16x32xf32>
    %c0_5 = arith.constant 0 : index
    %c0_6 = arith.constant 0 : index
    %18 = vector.load %arg4[%c0_5, %c0_6] : memref<32x32xf32, #tpu.memory_space<vmem>>, vector<32x32xf32>
    %c0_7 = arith.constant 0 : index
    %c0_8 = arith.constant 0 : index
    %19 = vector.load %arg5[%c0_7, %c0_8] : memref<1x32xf32, #tpu.memory_space<vmem>>, vector<1x32xf32>
    %cst_9 = arith.constant dense<0.000000e+00> : vector<16x32xf32>
    %20 = tpu.matmul %17, %18, %cst_9 {dimension_numbers = #tpu.dot_dimension_numbers<[1], [0], [0], [1], [0, 0, 1, 1], [], []>} : vector<16x32xf32>, vector<32x32xf32>, vector<16x32xf32> -> vector<16x32xf32>
    %21 = vector.broadcast %19 : vector<1x32xf32> to vector<16x32xf32>
    %22 = arith.addf %20, %21 : vector<16x32xf32>
    %cst_10 = arith.constant 0.000000e+00 : f32
    %23 = vector.broadcast %cst_10 : f32 to vector<16x32xf32>
    %24 = arith.maximumf %22, %23 : vector<16x32xf32>
    %c0_11 = arith.constant 0 : index
    %c0_12 = arith.constant 0 : index
    %25 = vector.load %arg6[%c0_11, %c0_12] : memref<32x32xf32, #tpu.memory_space<vmem>>, vector<32x32xf32>
    %c0_13 = arith.constant 0 : index
    %c0_14 = arith.constant 0 : index
    %26 = vector.load %arg7[%c0_13, %c0_14] : memref<1x32xf32, #tpu.memory_space<vmem>>, vector<1x32xf32>
    %cst_15 = arith.constant dense<0.000000e+00> : vector<16x32xf32>
    %27 = tpu.matmul %24, %25, %cst_15 {dimension_numbers = #tpu.dot_dimension_numbers<[1], [0], [0], [1], [0, 0, 1, 1], [], []>} : vector<16x32xf32>, vector<32x32xf32>, vector<16x32xf32> -> vector<16x32xf32>
    %28 = vector.broadcast %26 : vector<1x32xf32> to vector<16x32xf32>
    %29 = arith.addf %27, %28 : vector<16x32xf32>
    %cst_16 = arith.constant 0.000000e+00 : f32
    %30 = vector.broadcast %cst_16 : f32 to vector<16x32xf32>
    %31 = arith.maximumf %29, %30 : vector<16x32xf32>
    %c0_17 = arith.constant 0 : index
    %c0_18 = arith.constant 0 : index
    %32 = vector.load %arg8[%c0_17, %c0_18] : memref<32x128xf32, #tpu.memory_space<vmem>>, vector<32x128xf32>
    %c0_19 = arith.constant 0 : index
    %c0_20 = arith.constant 0 : index
    %33 = vector.load %arg9[%c0_19, %c0_20] : memref<1x128xf32, #tpu.memory_space<vmem>>, vector<1x128xf32>
    %cst_21 = arith.constant dense<0.000000e+00> : vector<16x128xf32>
    %34 = tpu.matmul %31, %32, %cst_21 {dimension_numbers = #tpu.dot_dimension_numbers<[1], [0], [0], [1], [0, 0, 1, 1], [], []>} : vector<16x32xf32>, vector<32x128xf32>, vector<16x128xf32> -> vector<16x128xf32>
    %35 = vector.broadcast %33 : vector<1x128xf32> to vector<16x128xf32>
    %36 = arith.addf %34, %35 : vector<16x128xf32>
    %c0_22 = arith.constant 0 : index
    %c0_23 = arith.constant 0 : index
    %37 = vector.load %arg10[%c0_22, %c0_23] : memref<16x128xf32, #tpu.memory_space<vmem>>, vector<16x128xf32>
    tpu.vector_store %arg10[%c0_22, %c0_23], %36 {strides = array<i32>} : memref<16x128xf32, #tpu.memory_space<vmem>>, vector<16x128xf32>,
    return
  }
  func.func @transform_0(%arg0: i32) -> (i32, i32) {
    %c0_i32 = arith.constant 0 : i32
    %c0_i32_0 = arith.constant 0 : i32
    return %arg0, %c0_i32 : i32, i32
  }
  func.func @transform_1(%arg0: i32) -> (i32, i32) {
    %c0_i32 = arith.constant 0 : i32
    %c0_i32_0 = arith.constant 0 : i32
    %c0_i32_1 = arith.constant 0 : i32
    return %c0_i32, %c0_i32_0 : i32, i32
  }
  func.func @transform_2(%arg0: i32) -> (i32, i32) {
    %c0_i32 = arith.constant 0 : i32
    %c0_i32_0 = arith.constant 0 : i32
    %c0_i32_1 = arith.constant 0 : i32
    return %c0_i32, %c0_i32_0 : i32, i32
  }
  func.func @transform_3(%arg0: i32) -> (i32, i32) {
    %c0_i32 = arith.constant 0 : i32
    %c0_i32_0 = arith.constant 0 : i32
    %c0_i32_1 = arith.constant 0 : i32
    return %c0_i32, %c0_i32_0 : i32, i32
  }
  func.func @transform_4(%arg0: i32) -> (i32, i32) {
    %c0_i32 = arith.constant 0 : i32
    %c0_i32_0 = arith.constant 0 : i32
    %c0_i32_1 = arith.constant 0 : i32
    return %c0_i32, %c0_i32_0 : i32, i32
  }
  func.func @transform_5(%arg0: i32) -> (i32, i32) {
    %c0_i32 = arith.constant 0 : i32
    %c0_i32_0 = arith.constant 0 : i32
    %c0_i32_1 = arith.constant 0 : i32
    return %c0_i32, %c0_i32_0 : i32, i32
  }
  func.func @transform_6(%arg0: i32) -> (i32, i32) {
    %c0_i32 = arith.constant 0 : i32
    %c0_i32_0 = arith.constant 0 : i32
    %c0_i32_1 = arith.constant 0 : i32
    return %c0_i32, %c0_i32_0 : i32, i32
  }
  func.func @transform_7(%arg0: i32) -> (i32, i32) {
    %c0_i32 = arith.constant 0 : i32
    %c0_i32_0 = arith.constant 0 : i32
    %c0_i32_1 = arith.constant 0 : i32
    return %c0_i32, %c0_i32_0 : i32, i32
  }
  func.func @transform_8(%arg0: i32) -> (i32, i32) {
    %c0_i32 = arith.constant 0 : i32
    %c0_i32_0 = arith.constant 0 : i32
    %c0_i32_1 = arith.constant 0 : i32
    return %c0_i32, %c0_i32_0 : i32, i32
  }
  func.func @transform_9(%arg0: i32) -> (i32, i32) {
    %c0_i32 = arith.constant 0 : i32
    %c0_i32_0 = arith.constant 0 : i32
    return %arg0, %c0_i32 : i32, i32
  }
}

</mosaic_0001>

<llo_original>
// kernel: tpu_custom_call.1
$region0: #{tpu_custom_call.1}
  #allocation0 [shape = 'u32[]', space=smem, size = 0x4, offset = 0x4, fixed_abs, tag = 'smem constant byte address 0x4 - core index']
  #allocation1 [shape = 'u32[144,128]{1,0:T(1,128)}', space=vmem, size = 0x12000, scoped, tag = 'internal scratch']
  %s0 = inlined_call_operand.vmem [shape: f32[16,2], index: 0, kind: input, shape index: {}]
  %s1 = inlined_call_operand.vmem [shape: f32[2,32], index: 1, kind: input, shape index: {}]
  %s2 = inlined_call_operand.vmem [shape: f32[1,32], index: 2, kind: input, shape index: {}]
  %s3 = inlined_call_operand.hbm [shape: f32[32,32], index: 3, kind: input, shape index: {}]
  %s4 = inlined_call_operand.vmem [shape: f32[1,32], index: 4, kind: input, shape index: {}]
  %s5 = inlined_call_operand.hbm [shape: f32[32,32], index: 5, kind: input, shape index: {}]
  %s6 = inlined_call_operand.vmem [shape: f32[1,32], index: 6, kind: input, shape index: {}]
  %s7 = inlined_call_operand.hbm [shape: f32[32,128], index: 7, kind: input, shape index: {}]
  %s8 = inlined_call_operand.vmem [shape: f32[1,128], index: 8, kind: input, shape index: {}]
  %s9 = inlined_call_operand.hbm [shape: f32[16,128], index: 9, kind: output, shape index: {}]
  %s10 = sld [smem:[#allocation0]]
  $region58: #{tpu_custom_call.1} parent=0
    _
  %s12 = ssub.s32 1, %s10
  %s13 = scalar_select 0, %s12, %s10
  $region1: #{tpu_custom_call.1} parent=0
    #allocation2 [shape = 'u8[16384]{0}', space=vmem, size = 0x4000, scoped, tag = 'input window, operand 3, single buffered']
    #allocation3 [shape = 's32[1]{0}', space=sflag, size = 0x4, scoped, tag = 'scoped memory for tpu_custom_call.1']
    #allocation4 [shape = 's32[1]{0}', space=sflag, size = 0x4, scoped, tag = 'scoped memory for tpu_custom_call.1']
    #allocation5 [shape = 'u8[16384]{0}', space=vmem, size = 0x4000, scoped, tag = 'input window, operand 5, single buffered']
    #allocation6 [shape = 's32[1]{0}', space=sflag, size = 0x4, scoped, tag = 'scoped memory for tpu_custom_call.1']
    #allocation7 [shape = 'u8[16384]{0}', space=vmem, size = 0x4000, scoped, tag = 'input window, operand 7, single buffered']
    #allocation8 [shape = 'u8[8192]{0}', space=vmem, size = 0x2000, scoped, tag = 'output window, operand 0, single buffered']
    %14 = vsyncpa [#allocation3], 0
    %15 = vsyncpa [#allocation6], 0
    %16 = vsyncpa [#allocation4], 0
    // Predicated region
    $region2: #{tpu_custom_call.1} parent=1 // pred_check
      _
    $region3: #{tpu_custom_call.1} parent=1 // pred_check_branch
      %18 = sbr.rel (0) target = $region5
    $region4: #{tpu_custom_call.1} parent=1 // pred_region
      _
    $region5: #{tpu_custom_call.1} parent=1 // pred_fallthru
      _
    // Predicated region
    $region6: #{tpu_custom_call.1} parent=1 // pred_check
      _
    $region7: #{tpu_custom_call.1} parent=1 // pred_check_branch
      %20 = sbr.rel (0) target = $region9
    $region8: #{tpu_custom_call.1} parent=1 // pred_region
      _
    $region9: #{tpu_custom_call.1} parent=1 // pred_fallthru
      _
    // Predicated region
    $region10: #{tpu_custom_call.1} parent=1 // pred_check
      _
    $region11: #{tpu_custom_call.1} parent=1 // pred_check_branch
      %22 = sbr.rel (0) target = $region13
    $region12: #{tpu_custom_call.1} parent=1 // pred_region
      _
    $region13: #{tpu_custom_call.1} parent=1 // pred_fallthru
      _
    // Predicated region
    $region14: #{tpu_custom_call.1} parent=1 // pred_check
      _
    $region15: #{tpu_custom_call.1} parent=1 // pred_check_branch
      %24 = sbr.rel (0) target = $region17
    $region16: #{tpu_custom_call.1} parent=1 // pred_region
      %s26 = ssub.s32 512, 512
      %27 = vsyncadd [#allocation3], %s26
      %s28 = sshll.u32 [#allocation2], 4
      %s29 = int_to_ptr.vmem [resolvable:$true] %s28
      %34 = dma.hbm_to_vmem [thread:$0]  %s3, 512, %s29, [#allocation3], 128, 128, 8
    $region17: #{tpu_custom_call.1} parent=1 // pred_fallthru
      _
    // Predicated region
    $region18: #{tpu_custom_call.1} parent=1 // pred_check
      _
    $region19: #{tpu_custom_call.1} parent=1 // pred_check_branch
      %36 = sbr.rel (0) target = $region21
    $region20: #{tpu_custom_call.1} parent=1 // pred_region
      _
    $region21: #{tpu_custom_call.1} parent=1 // pred_fallthru
      _
    // Predicated region
    $region22: #{tpu_custom_call.1} parent=1 // pred_check
      _
    $region23: #{tpu_custom_call.1} parent=1 // pred_check_branch
      %38 = sbr.rel (0) target = $region25
    $region24: #{tpu_custom_call.1} parent=1 // pred_region
      %s40 = ssub.s32 512, 512
      %41 = vsyncadd [#allocation6], %s40
      %s42 = sshll.u32 [#allocation5], 4
      %s43 = int_to_ptr.vmem [resolvable:$true] %s42
      %48 = dma.hbm_to_vmem [thread:$0]  %s5, 512, %s43, [#allocation6], 128, 128, 8
    $region25: #{tpu_custom_call.1} parent=1 // pred_fallthru
      _
    // Predicated region
    $region26: #{tpu_custom_call.1} parent=1 // pred_check
      _
    $region27: #{tpu_custom_call.1} parent=1 // pred_check_branch
      %50 = sbr.rel (0) target = $region29
    $region28: #{tpu_custom_call.1} parent=1 // pred_region
      _
    $region29: #{tpu_custom_call.1} parent=1 // pred_fallthru
      _
    // Predicated region
    $region30: #{tpu_custom_call.1} parent=1 // pred_check
      _
    $region31: #{tpu_custom_call.1} parent=1 // pred_check_branch
      %52 = sbr.rel (0) target = $region33
    $region32: #{tpu_custom_call.1} parent=1 // pred_region
      %s54 = ssub.s32 512, 512
      %55 = vsyncadd [#allocation6], %s54
      %s56 = sshll.u32 [#allocation7], 4
      %s57 = int_to_ptr.vmem [resolvable:$true] %s56
      %62 = dma.hbm_to_vmem [thread:$0]  %s7, 512, %s57, [#allocation6], 128, 128, 8
    $region33: #{tpu_custom_call.1} parent=1 // pred_fallthru
      _
    // Predicated region
    $region34: #{tpu_custom_call.1} parent=1 // pred_check
      _
    $region35: #{tpu_custom_call.1} parent=1 // pred_check_branch
      %64 = sbr.rel (0) target = $region37
    $region36: #{tpu_custom_call.1} parent=1 // pred_region
      _
    $region37: #{tpu_custom_call.1} parent=1 // pred_fallthru
      _
    // Predicated region
    $region38: #{tpu_custom_call.1} parent=1 // pred_check
      _
    $region39: #{tpu_custom_call.1} parent=1 // pred_check_branch
      %66 = sbr.rel (0) target = $region41
    $region40: #{tpu_custom_call.1} parent=1 // pred_region
      %67 = dma.done [#allocation3], 512
    $region41: #{tpu_custom_call.1} parent=1 // pred_fallthru
      _
    // Predicated region
    $region42: #{tpu_custom_call.1} parent=1 // pred_check
      _
    $region43: #{tpu_custom_call.1} parent=1 // pred_check_branch
      %69 = sbr.rel (0) target = $region45
    $region44: #{tpu_custom_call.1} parent=1 // pred_region
      %70 = dma.done [#allocation6], 512
    $region45: #{tpu_custom_call.1} parent=1 // pred_fallthru
      _
    // Predicated region
    $region46: #{tpu_custom_call.1} parent=1 // pred_check
      _
    $region47: #{tpu_custom_call.1} parent=1 // pred_check_branch
      %72 = sbr.rel (0) target = $region49
    $region48: #{tpu_custom_call.1} parent=1 // pred_region
      %73 = dma.done [#allocation6], 512
    $region49: #{tpu_custom_call.1} parent=1 // pred_fallthru
      _
    %v74 = vld [vmem:[%s1] sm:$0x3]
    %v75 = vld [vmem:[%s2] sm:$0x1]
    %v76 = vld [vmem:[%s0] sm:$0xff]
    %v77 = vld [vmem:[%s0 + $0x8] sm:$0xff]
    %79 = vset.pattern.permute.xlu0 0
    %80 = vperm.xlu0 %79, %v76
    %v81 = vpop.permute.xlu0 %80
    %84 = vset.pattern.permute.xlu0 0
    %85 = vperm.xlu0 %84, %v77
    %v86 = vpop.permute.xlu0 %85
    %v88 = vlaneseq
    %v89 = vshrl.u32 %v88, 7
    %v90 = vsub.s32 0, %v89
    %v91 = vrot.slane %v74, %v90
    %v92 = vmul.f32 %v81, %v91
    %v93 = vmul.f32 %v86, %v91
    %v95 = vlaneseq
    %v96 = vshrl.u32 %v95, 7
    %v97 = vsub.s32 0, %v96
    %v98 = vrot.slane %v75, %v97
    %v100 = vadd.f32 %v98, %v92
    %v101 = vadd.f32 %v98, %v93
    %102 = vset.pattern.permute.xlu0 1
    %103 = vperm.xlu0 %102, %v76
    %v104 = vpop.permute.xlu0 %103
    %106 = vset.pattern.permute.xlu0 1
    %107 = vperm.xlu0 %106, %v77
    %v108 = vpop.permute.xlu0 %107
    %v110 = vlaneseq
    %v111 = vshrl.u32 %v110, 7
    %v112 = vsub.s32 1, %v111
    %v113 = vrot.slane %v74, %v112
    %v114 = vmul.f32 %v104, %v113
    %v115 = vmul.f32 %v108, %v113
    %v116 = vadd.f32 %v100, %v114
    %v117 = vadd.f32 %v101, %v115
    %v118 = vmax.f32 %v116, 0.0
    %v119 = vmax.f32 %v117, 0.0
    %v120 = vld [vmem:[#allocation2] sm:$0xff]
    %v121 = vld [vmem:[#allocation2 + $0x8] sm:$0xff]
    %v122 = vld [vmem:[#allocation2 + $0x10] sm:$0xff]
    %v123 = vld [vmem:[#allocation2 + $0x18] sm:$0xff]
    %v124 = vld [vmem:[%s4] sm:$0x1]
    %v126 = vlaneseq
    %v127 = vshrl.u32 %v126, 7
    %v128 = vsub.s32 0, %v127
    %v129 = vrot.slane %v124, %v128
    %vm131 = vcmask 261120
    %v133 = vsel %vm131, %v118, 0
    %v136 = vsel %vm131, %v119, 0
    %138 = vmatprep.subr.mxu0 0.0
    %139 = vmatpush1.msra.mxu0 0.0
    %140 = vmatprep.subr.mxu0 0.0
    %141 = vmatpush1.msra.mxu0 0.0
    %142 = vmatprep.subr.mxu0 0.0
    %143 = vmatpush1.msra.mxu0 0.0
    %144 = vmatprep.subr.mxu0 0.0
    %145 = vmatpush1.msra.mxu0 0.0
    %146 = vmatprep.subr.mxu0 0.0
    %147 = vmatpush1.msra.mxu0 0.0
    %148 = vmatprep.subr.mxu0 0.0
    %149 = vmatpush1.msra.mxu0 0.0
    %150 = vmatprep.subr.mxu0 0.0
    %151 = vmatpush1.msra.mxu0 0.0
    %152 = vmatprep.subr.mxu0 0.0
    %153 = vmatpush1.msra.mxu0 0.0
    %154 = vmatprep.subr.mxu0 0.0
    %155 = vmatpush1.msra.mxu0 0.0
    %156 = vmatprep.subr.mxu0 0.0
    %157 = vmatpush1.msra.mxu0 0.0
    %158 = vmatprep.subr.mxu0 0.0
    %159 = vmatpush1.msra.mxu0 0.0
    %160 = vmatprep.subr.mxu0 0.0
    %161 = vmatpush1.msra.mxu0 0.0
    %162 = vmatprep.subr.mxu0 0.0
    %163 = vmatpush1.msra.mxu0 %v123
    %164 = vmatprep.subr.mxu0 0.0
    %165 = vmatpush1.msra.mxu0 %v122
    %166 = vmatprep.subr.mxu0 0.0
    %167 = vmatpush1.msra.mxu0 %v121
    %168 = vmatprep.subr.mxu0 0.0
    %169 = vmatpush1.msra.mxu0 %v120
    %170 = vmatprep.subr.mxu0 0.0
    %171 = vmatpush2.msra.mxu0 0.0
    %172 = vmatprep.subr.mxu0 0.0
    %173 = vmatpush2.msra.mxu0 0.0
    %174 = vmatprep.subr.mxu0 0.0
    %175 = vmatpush2.msra.mxu0 0.0
    %176 = vmatprep.subr.mxu0 0.0
    %177 = vmatpush2.msra.mxu0 0.0
    %178 = vmatprep.subr.mxu0 0.0
    %179 = vmatpush2.msra.mxu0 0.0
    %180 = vmatprep.subr.mxu0 0.0
    %181 = vmatpush2.msra.mxu0 0.0
    %182 = vmatprep.subr.mxu0 0.0
    %183 = vmatpush2.msra.mxu0 0.0
    %184 = vmatprep.subr.mxu0 0.0
    %185 = vmatpush2.msra.mxu0 0.0
    %186 = vmatprep.subr.mxu0 0.0
    %187 = vmatpush2.msra.mxu0 0.0
    %188 = vmatprep.subr.mxu0 0.0
    %189 = vmatpush2.msra.mxu0 0.0
    %190 = vmatprep.subr.mxu0 0.0
    %191 = vmatpush2.msra.mxu0 0.0
    %192 = vmatprep.subr.mxu0 0.0
    %193 = vmatpush2.msra.mxu0 0.0
    %194 = vmatprep.subr.mxu0 0.0
    %195 = vmatpush2.msra.mxu0 0.0
    %196 = vmatprep.subr.mxu0 0.0
    %197 = vmatpush2.msra.mxu0 0.0
    %198 = vmatprep.subr.mxu0 0.0
    %199 = vmatpush2.msra.mxu0 0.0
    %200 = vmatprep.subr.mxu0 0.0
    %201 = vmatpush2.msra.mxu0 0.0
    %202 = vmatprep.mubr.f32.mxu0 0.0
    %203 = vmatmul.mubr.f32.gmra.mxu0 %v133
    %v204 = vpop.f32.mrf.mxu0
    %v205 = vadd.f32 %v129, %v204
    %v206 = vpop.f32.mrf.mxu0
    %207 = vmatprep.mubr.f32.mxu0 0.0
    %208 = vmatmul.mubr.f32.gmra.mxu0 %v136
    %v209 = vpop.f32.mrf.mxu0
    %v210 = vadd.f32 %v129, %v209
    %v211 = vpop.f32.mrf.mxu0
    %212 = vdwg.mxu0
    %v213 = vmax.f32 %v205, 0.0
    %v214 = vmax.f32 %v210, 0.0
    %v215 = vld [vmem:[#allocation5] sm:$0xff]
    %v216 = vld [vmem:[#allocation5 + $0x8] sm:$0xff]
    %v217 = vld [vmem:[#allocation5 + $0x10] sm:$0xff]
    %v218 = vld [vmem:[#allocation5 + $0x18] sm:$0xff]
    %v219 = vld [vmem:[%s6] sm:$0x1]
    %v221 = vlaneseq
    %v222 = vshrl.u32 %v221, 7
    %v223 = vsub.s32 0, %v222
    %v224 = vrot.slane %v219, %v223
    %v227 = vsel %vm131, %v213, 0
    %v230 = vsel %vm131, %v214, 0
    %232 = vmatprep.subr.mxu0 0.0
    %233 = vmatpush1.msra.mxu0 0.0
    %234 = vmatprep.subr.mxu0 0.0
    %235 = vmatpush1.msra.mxu0 0.0
    %236 = vmatprep.subr.mxu0 0.0
    %237 = vmatpush1.msra.mxu0 0.0
    %238 = vmatprep.subr.mxu0 0.0
    %239 = vmatpush1.msra.mxu0 0.0
    %240 = vmatprep.subr.mxu0 0.0
    %241 = vmatpush1.msra.mxu0 0.0
    %242 = vmatprep.subr.mxu0 0.0
    %243 = vmatpush1.msra.mxu0 0.0
    %244 = vmatprep.subr.mxu0 0.0
    %245 = vmatpush1.msra.mxu0 0.0
    %246 = vmatprep.subr.mxu0 0.0
    %247 = vmatpush1.msra.mxu0 0.0
    %248 = vmatprep.subr.mxu0 0.0
    %249 = vmatpush1.msra.mxu0 0.0
    %250 = vmatprep.subr.mxu0 0.0
    %251 = vmatpush1.msra.mxu0 0.0
    %252 = vmatprep.subr.mxu0 0.0
    %253 = vmatpush1.msra.mxu0 0.0
    %254 = vmatprep.subr.mxu0 0.0
    %255 = vmatpush1.msra.mxu0 0.0
    %256 = vmatprep.subr.mxu0 0.0
    %257 = vmatpush1.msra.mxu0 %v218
    %258 = vmatprep.subr.mxu0 0.0
    %259 = vmatpush1.msra.mxu0 %v217
    %260 = vmatprep.subr.mxu0 0.0
    %261 = vmatpush1.msra.mxu0 %v216
    %262 = vmatprep.subr.mxu0 0.0
    %263 = vmatpush1.msra.mxu0 %v215
    %264 = vmatprep.subr.mxu0 0.0
    %265 = vmatpush2.msra.mxu0 0.0
    %266 = vmatprep.subr.mxu0 0.0
    %267 = vmatpush2.msra.mxu0 0.0
    %268 = vmatprep.subr.mxu0 0.0
    %269 = vmatpush2.msra.mxu0 0.0
    %270 = vmatprep.subr.mxu0 0.0
    %271 = vmatpush2.msra.mxu0 0.0
    %272 = vmatprep.subr.mxu0 0.0
    %273 = vmatpush2.msra.mxu0 0.0
    %274 = vmatprep.subr.mxu0 0.0
    %275 = vmatpush2.msra.mxu0 0.0
    %276 = vmatprep.subr.mxu0 0.0
    %277 = vmatpush2.msra.mxu0 0.0
    %278 = vmatprep.subr.mxu0 0.0
    %279 = vmatpush2.msra.mxu0 0.0
    %280 = vmatprep.subr.mxu0 0.0
    %281 = vmatpush2.msra.mxu0 0.0
    %282 = vmatprep.subr.mxu0 0.0
    %283 = vmatpush2.msra.mxu0 0.0
    %284 = vmatprep.subr.mxu0 0.0
    %285 = vmatpush2.msra.mxu0 0.0
    %286 = vmatprep.subr.mxu0 0.0
    %287 = vmatpush2.msra.mxu0 0.0
    %288 = vmatprep.subr.mxu0 0.0
    %289 = vmatpush2.msra.mxu0 0.0
    %290 = vmatprep.subr.mxu0 0.0
    %291 = vmatpush2.msra.mxu0 0.0
    %292 = vmatprep.subr.mxu0 0.0
    %293 = vmatpush2.msra.mxu0 0.0
    %294 = vmatprep.subr.mxu0 0.0
    %295 = vmatpush2.msra.mxu0 0.0
    %296 = vmatprep.mubr.f32.mxu0 0.0
    %297 = vmatmul.mubr.f32.gmra.mxu0 %v227
    %v298 = vpop.f32.mrf.mxu0
    %v299 = vadd.f32 %v224, %v298
    %v300 = vpop.f32.mrf.mxu0
    %301 = vmatprep.mubr.f32.mxu0 0.0
    %302 = vmatmul.mubr.f32.gmra.mxu0 %v230
    %v303 = vpop.f32.mrf.mxu0
    %v304 = vadd.f32 %v224, %v303
    %v305 = vpop.f32.mrf.mxu0
    %306 = vdwg.mxu0
    %v307 = vmax.f32 %v299, 0.0
    %v308 = vmax.f32 %v304, 0.0
    %v309 = vld [vmem:[#allocation7] sm:$0xff]
    %v310 = vld [vmem:[#allocation7 + $0x8] sm:$0xff]
    %v311 = vld [vmem:[#allocation7 + $0x10] sm:$0xff]
    %v312 = vld [vmem:[#allocation7 + $0x18] sm:$0xff]
    %v313 = vld [vmem:[%s8] sm:$0x1]
    %v315 = vlaneseq
    %v316 = vshrl.u32 %v315, 7
    %v317 = vsub.s32 0, %v316
    %v318 = vrot.slane %v313, %v317
    %v321 = vsel %vm131, %v307, 0
    %v324 = vsel %vm131, %v308, 0
    %326 = vmatprep.subr.mxu0 0.0
    %327 = vmatpush1.msra.mxu0 0.0
    %328 = vmatprep.subr.mxu0 0.0
    %329 = vmatpush1.msra.mxu0 0.0
    %330 = vmatprep.subr.mxu0 0.0
    %331 = vmatpush1.msra.mxu0 0.0
    %332 = vmatprep.subr.mxu0 0.0
    %333 = vmatpush1.msra.mxu0 0.0
    %334 = vmatprep.subr.mxu0 0.0
    %335 = vmatpush1.msra.mxu0 0.0
    %336 = vmatprep.subr.mxu0 0.0
    %337 = vmatpush1.msra.mxu0 0.0
    %338 = vmatprep.subr.mxu0 0.0
    %339 = vmatpush1.msra.mxu0 0.0
    %340 = vmatprep.subr.mxu0 0.0
    %341 = vmatpush1.msra.mxu0 0.0
    %342 = vmatprep.subr.mxu0 0.0
    %343 = vmatpush1.msra.mxu0 0.0
    %344 = vmatprep.subr.mxu0 0.0
    %345 = vmatpush1.msra.mxu0 0.0
    %346 = vmatprep.subr.mxu0 0.0
    %347 = vmatpush1.msra.mxu0 0.0
    %348 = vmatprep.subr.mxu0 0.0
    %349 = vmatpush1.msra.mxu0 0.0
    %350 = vmatprep.subr.mxu0 0.0
    %351 = vmatpush1.msra.mxu0 %v312
    %352 = vmatprep.subr.mxu0 0.0
    %353 = vmatpush1.msra.mxu0 %v311
    %354 = vmatprep.subr.mxu0 0.0
    %355 = vmatpush1.msra.mxu0 %v310
    %356 = vmatprep.subr.mxu0 0.0
    %357 = vmatpush1.msra.mxu0 %v309
    %358 = vmatprep.subr.mxu0 0.0
    %359 = vmatpush2.msra.mxu0 0.0
    %360 = vmatprep.subr.mxu0 0.0
    %361 = vmatpush2.msra.mxu0 0.0
    %362 = vmatprep.subr.mxu0 0.0
    %363 = vmatpush2.msra.mxu0 0.0
    %364 = vmatprep.subr.mxu0 0.0
    %365 = vmatpush2.msra.mxu0 0.0
    %366 = vmatprep.subr.mxu0 0.0
    %367 = vmatpush2.msra.mxu0 0.0
    %368 = vmatprep.subr.mxu0 0.0
    %369 = vmatpush2.msra.mxu0 0.0
    %370 = vmatprep.subr.mxu0 0.0
    %371 = vmatpush2.msra.mxu0 0.0
    %372 = vmatprep.subr.mxu0 0.0
    %373 = vmatpush2.msra.mxu0 0.0
    %374 = vmatprep.subr.mxu0 0.0
    %375 = vmatpush2.msra.mxu0 0.0
    %376 = vmatprep.subr.mxu0 0.0
    %377 = vmatpush2.msra.mxu0 0.0
    %378 = vmatprep.subr.mxu0 0.0
    %379 = vmatpush2.msra.mxu0 0.0
    %380 = vmatprep.subr.mxu0 0.0
    %381 = vmatpush2.msra.mxu0 0.0
    %382 = vmatprep.subr.mxu0 0.0
    %383 = vmatpush2.msra.mxu0 0.0
    %384 = vmatprep.subr.mxu0 0.0
    %385 = vmatpush2.msra.mxu0 0.0
    %386 = vmatprep.subr.mxu0 0.0
    %387 = vmatpush2.msra.mxu0 0.0
    %388 = vmatprep.subr.mxu0 0.0
    %389 = vmatpush2.msra.mxu0 0.0
    %390 = vmatprep.mubr.f32.mxu0 0.0
    %391 = vmatmul.mubr.f32.gmra.mxu0 %v321
    %v392 = vpop.f32.mrf.mxu0
    %v393 = vadd.f32 %v318, %v392
    %v394 = vpop.f32.mrf.mxu0
    %395 = vmatprep.mubr.f32.mxu0 0.0
    %396 = vmatmul.mubr.f32.gmra.mxu0 %v324
    %v397 = vpop.f32.mrf.mxu0
    %v398 = vadd.f32 %v318, %v397
    %v399 = vpop.f32.mrf.mxu0
    %400 = vdwg.mxu0
    %401 = vst [vmem:[#allocation8] sm:$0xff] %v393
    %402 = vst [vmem:[#allocation8 + $0x8] sm:$0xff] %v398
    // Predicated region
    $region50: #{tpu_custom_call.1} parent=1 // pred_check
      _
    $region51: #{tpu_custom_call.1} parent=1 // pred_check_branch
      %404 = sbr.rel (0) target = $region53
    $region52: #{tpu_custom_call.1} parent=1 // pred_region
      %s406 = ssub.s32 256, 256
      %407 = vsyncadd [#allocation4], %s406
      %s408 = sshll.u32 [#allocation8], 4
      %s409 = int_to_ptr.vmem [resolvable:$true] %s408
      %414 = dma.vmem_to_hbm [thread:$0]  %s409, 256, %s9, [#allocation4], 128, 128, 8
    $region53: #{tpu_custom_call.1} parent=1 // pred_fallthru
      _
    // Predicated region
    $region54: #{tpu_custom_call.1} parent=1 // pred_check
      _
    $region55: #{tpu_custom_call.1} parent=1 // pred_check_branch
      %416 = sbr.rel (0) target = $region57
    $region56: #{tpu_custom_call.1} parent=1 // pred_region
      %417 = dma.done [#allocation4], 256
    $region57: #{tpu_custom_call.1} parent=1 // pred_fallthru
      _
    %418 = vsyncpa [#allocation3], 1
    %419 = vsyncpa [#allocation6], 1
    %420 = vsyncpa [#allocation4], 1

</llo_original>
